<compile_context>
chip_gen: v6e
topology: v6e:2x2x1
jax: 0.10.0
libtpu: 0.0.40
codegen_flags: <defaults>
</compile_context>

<pallas_src>
import jax
import jax.numpy as jnp
from jax.experimental import pallas as pl
from jax.experimental.pallas import tpu as pltpu


_NSLOTS = 16  # max in-flight row DMAs per grid step


def _embed_gather_kernel(ids_ref, table_hbm, pos_ref, out_ref, gather_buf, sems):
    # ids_ref   : (B*S,) int32 in SMEM (scalar prefetch)
    # table_hbm : (V, E_pad) f32, raw HBM ref (memory_space=pl.ANY)
    # pos_ref   : (1, TS, E_pad) f32 VMEM  -- positional rows for this seq tile
    # out_ref   : (1, TS, E_pad) f32 VMEM
    # gather_buf: (TS, E_pad) f32 VMEM scratch -- gathered embedding rows
    # sems      : (_NSLOTS,) DMA semaphores
    TS = out_ref.shape[1]
    j = pl.program_id(0)          # sequence-tile index (outer)
    b = pl.program_id(1)          # batch index (inner -> pos tile stays resident)
    S = pl.num_programs(0) * TS
    base = b * S + j * TS

    def start_row(i):
        rid = ids_ref[base + i]
        pltpu.make_async_copy(
            table_hbm.at[rid], gather_buf.at[i], sems.at[i % _NSLOTS]).start()

    def wait_row(i):
        # Descriptor only needs matching shapes to account the wait amount.
        pltpu.make_async_copy(
            table_hbm.at[0], gather_buf.at[i], sems.at[i % _NSLOTS]).wait()

    nprime = min(_NSLOTS, TS)
    for i in range(nprime):          # prime the DMA window (static unroll)
        start_row(i)

    if TS > nprime:                  # steady state: wait row i, launch row i+nprime
        @pl.loop(0, TS - nprime)
        def _steady(i):
            wait_row(i)
            start_row(i + nprime)

    @pl.loop(TS - nprime, TS)        # drain remaining in-flight rows
    def _drain(i):
        wait_row(i)

    # Fused positional-encoding add + lane-dense store of the whole row tile.
    out_ref[0] = gather_buf[...] + pos_ref[0]


def _pick_row_tile(S):
    for t in (512, 256, 128, 64, 32, 16, 8):
        if S % t == 0:
            return t
    return S  # small/odd S: one full-seq tile (block == full dim is legal)


def embeddings_forward(x, table, pos_enc):
    """x: (B, S) int; table: (V, E) f32; pos_enc: (1, max_len, E) f32 -> (B, S, E) f32."""
    B, S = x.shape
    V, E = table.shape
    max_len = pos_enc.shape[1]
    if S > max_len:
        raise ValueError(f"sequence length {S} exceeds max_len {max_len}")

    # Lane-align the embedding dim (multiple of 128).  In a real model the
    # table / positional encoding would be stored pre-padded; pad once here.
    E_pad = ((E + 127) // 128) * 128
    pad = E_pad - E
    table_p = jnp.pad(table, ((0, 0), (0, pad))) if pad else table
    pos_p = pos_enc[:, :S, :]
    pos_p = jnp.pad(pos_p, ((0, 0), (0, 0), (0, pad))) if pad else pos_p

    ids_flat = x.astype(jnp.int32).reshape(-1)   # -> SMEM via scalar prefetch
    # TODO(synk): out-of-range / negative token ids are not validated here
    # (PyTorch nn.Embedding raises); ids must lie in [0, V).

    TS = _pick_row_tile(S)
    grid = (S // TS, B)   # batch innermost: positional tile reused across B

    out = pl.pallas_call(
        _embed_gather_kernel,
        out_shape=jax.ShapeDtypeStruct((B, S, E_pad), jnp.float32),
        grid_spec=pltpu.PrefetchScalarGridSpec(
            num_scalar_prefetch=1,
            grid=grid,
            in_specs=[
                pl.BlockSpec(memory_space=pl.ANY),                          # table in HBM
                pl.BlockSpec((1, TS, E_pad), lambda j, b, ids: (0, j, 0)),  # pos tile
            ],
            out_specs=pl.BlockSpec((1, TS, E_pad), lambda j, b, ids: (b, j, 0)),
            scratch_shapes=[
                pltpu.VMEM((TS, E_pad), jnp.float32),
                pltpu.SemaphoreType.DMA((_NSLOTS,)),
            ],
        ),
        compiler_params=pltpu.CompilerParams(
            dimension_semantics=("parallel", "parallel")),
    )(ids_flat, table_p, pos_p)

    return out[..., :E] if pad else out


if __name__ == "__main__":
    B, S, V, E, MAX_LEN = 2, 8, 64, 32, 16
    key = jax.random.PRNGKey(0)
    k_ids, k_tab, k_pos = jax.random.split(key, 3)

    x = jax.random.randint(k_ids, (B, S), 0, V, dtype=jnp.int32)
    table = jax.random.normal(k_tab, (V, E), dtype=jnp.float32)
    # NOTE: PyTorch initializes positional_encoding to zeros; small random
    # values are used so the broadcast add is exercised non-trivially
    # (forward semantics -- gather + broadcast add -- are identical).
    pos_enc = 0.02 * jax.random.normal(k_pos, (1, MAX_LEN, E), dtype=jnp.float32)

    out = embeddings_forward(x, table, pos_enc)
    out = jax.block_until_ready(out)

    ref = jnp.take(table, x, axis=0) + pos_enc[:, :S, :]
    assert out.shape == (B, S, E), out.shape
    assert out.dtype == jnp.float32
    assert jnp.allclose(out, ref, atol=1e-6, rtol=1e-6), float(jnp.max(jnp.abs(out - ref)))
    print("KERNEL_OK")
</pallas_src>

<mosaic_0001>
module attributes {stable_mosaic.version = 11 : i64} {
  func.func @_embed_gather_kernel(%arg0: i32, %arg1: i32, %arg2: memref<16xi32, #tpu.memory_space<smem>>, %arg3: memref<64x128xf32, #tpu.memory_space<any>>, %arg4: memref<1x8x128xf32, #tpu.memory_space<vmem>>, %arg5: memref<1x8x128xf32, #tpu.memory_space<vmem>>, %arg6: memref<8x128xf32, #tpu.memory_space<vmem>>, %arg7: memref<16x!tpu.dma_semaphore, #tpu.memory_space<semaphore_mem>>) attributes {dimension_semantics = [#tpu.dimension_semantics<parallel>, #tpu.dimension_semantics<parallel>], iteration_bounds = array<i64: 1, 2>, scalar_prefetch = 1 : i64, scratch_operands = 2 : i64, tpu.core_type = #tpu.core_type<tc>, window_params = [{}, {transform_indices = @transform_1, window_bounds = array<i64: 1, 8, 128>}, {transform_indices = @transform_2, window_bounds = array<i64: 1, 8, 128>}]} {
    %c8_i32 = arith.constant 8 : i32
    %0 = arith.muli %arg1, %c8_i32 : i32
    %c8_i32_0 = arith.constant 8 : i32
    %1 = arith.muli %arg0, %c8_i32_0 : i32
    %2 = arith.addi %0, %1 : i32
    %c0_i32 = arith.constant 0 : i32
    %3 = arith.addi %2, %c0_i32 : i32
    %4 = arith.index_cast %3 : i32 to index
    %5 = memref.load %arg2[%4] : memref<16xi32, #tpu.memory_space<smem>>
    %c0_i32_1 = arith.constant 0 : i32
    %c0_i32_2 = arith.constant 0 : i32
    %c0_i32_3 = arith.constant 0 : i32
    %6 = tpu.memref_slice %arg3[%5, %c0_i32_3] : memref<64x128xf32, #tpu.memory_space<any>> -> memref<1x128xf32, #tpu.memory_space<any>>
    %7 = tpu.memref_squeeze %6 : memref<1x128xf32, #tpu.memory_space<any>> -> memref<128xf32, #tpu.memory_space<any>>
    %c0_i32_4 = arith.constant 0 : i32
    %8 = tpu.memref_slice %arg6[%c0_i32_1, %c0_i32_4] : memref<8x128xf32, #tpu.memory_space<vmem>> -> memref<1x128xf32, #tpu.memory_space<vmem>>
    %9 = tpu.memref_squeeze %8 : memref<1x128xf32, #tpu.memory_space<vmem>> -> memref<128xf32, #tpu.memory_space<vmem>>
    %10 = tpu.memref_slice %arg7[%c0_i32_2] : memref<16x!tpu.dma_semaphore, #tpu.memory_space<semaphore_mem>> -> memref<1x!tpu.dma_semaphore, #tpu.memory_space<semaphore_mem>>
    %11 = tpu.memref_squeeze %10 : memref<1x!tpu.dma_semaphore, #tpu.memory_space<semaphore_mem>> -> memref<!tpu.dma_semaphore, #tpu.memory_space<semaphore_mem>>
    tpu.enqueue_dma source(%7 : memref<128xf32, #tpu.memory_space<any>>) target(%9 : memref<128xf32, #tpu.memory_space<vmem>>) target_semaphore(%11 : memref<!tpu.dma_semaphore, #tpu.memory_space<semaphore_mem>>)
    %c1_i32 = arith.constant 1 : i32
    %12 = arith.addi %2, %c1_i32 : i32
    %13 = arith.index_cast %12 : i32 to index
    %14 = memref.load %arg2[%13] : memref<16xi32, #tpu.memory_space<smem>>
    %c1_i32_5 = arith.constant 1 : i32
    %c1_i32_6 = arith.constant 1 : i32
    %c0_i32_7 = arith.constant 0 : i32
    %15 = tpu.memref_slice %arg3[%14, %c0_i32_7] : memref<64x128xf32, #tpu.memory_space<any>> -> memref<1x128xf32, #tpu.memory_space<any>>
    %16 = tpu.memref_squeeze %15 : memref<1x128xf32, #tpu.memory_space<any>> -> memref<128xf32, #tpu.memory_space<any>>
    %c0_i32_8 = arith.constant 0 : i32
    %17 = tpu.memref_slice %arg6[%c1_i32_5, %c0_i32_8] : memref<8x128xf32, #tpu.memory_space<vmem>> -> memref<1x128xf32, #tpu.memory_space<vmem>>
    %18 = tpu.memref_squeeze %17 : memref<1x128xf32, #tpu.memory_space<vmem>> -> memref<128xf32, #tpu.memory_space<vmem>>
    %19 = tpu.memref_slice %arg7[%c1_i32_6] : memref<16x!tpu.dma_semaphore, #tpu.memory_space<semaphore_mem>> -> memref<1x!tpu.dma_semaphore, #tpu.memory_space<semaphore_mem>>
    %20 = tpu.memref_squeeze %19 : memref<1x!tpu.dma_semaphore, #tpu.memory_space<semaphore_mem>> -> memref<!tpu.dma_semaphore, #tpu.memory_space<semaphore_mem>>
    tpu.enqueue_dma source(%16 : memref<128xf32, #tpu.memory_space<any>>) target(%18 : memref<128xf32, #tpu.memory_space<vmem>>) target_semaphore(%20 : memref<!tpu.dma_semaphore, #tpu.memory_space<semaphore_mem>>)
    %c2_i32 = arith.constant 2 : i32
    %21 = arith.addi %2, %c2_i32 : i32
    %22 = arith.index_cast %21 : i32 to index
    %23 = memref.load %arg2[%22] : memref<16xi32, #tpu.memory_space<smem>>
    %c2_i32_9 = arith.constant 2 : i32
    %c2_i32_10 = arith.constant 2 : i32
    %c0_i32_11 = arith.constant 0 : i32
    %24 = tpu.memref_slice %arg3[%23, %c0_i32_11] : memref<64x128xf32, #tpu.memory_space<any>> -> memref<1x128xf32, #tpu.memory_space<any>>
    %25 = tpu.memref_squeeze %24 : memref<1x128xf32, #tpu.memory_space<any>> -> memref<128xf32, #tpu.memory_space<any>>
    %c0_i32_12 = arith.constant 0 : i32
    %26 = tpu.memref_slice %arg6[%c2_i32_9, %c0_i32_12] : memref<8x128xf32, #tpu.memory_space<vmem>> -> memref<1x128xf32, #tpu.memory_space<vmem>>
    %27 = tpu.memref_squeeze %26 : memref<1x128xf32, #tpu.memory_space<vmem>> -> memref<128xf32, #tpu.memory_space<vmem>>
    %28 = tpu.memref_slice %arg7[%c2_i32_10] : memref<16x!tpu.dma_semaphore, #tpu.memory_space<semaphore_mem>> -> memref<1x!tpu.dma_semaphore, #tpu.memory_space<semaphore_mem>>
    %29 = tpu.memref_squeeze %28 : memref<1x!tpu.dma_semaphore, #tpu.memory_space<semaphore_mem>> -> memref<!tpu.dma_semaphore, #tpu.memory_space<semaphore_mem>>
    tpu.enqueue_dma source(%25 : memref<128xf32, #tpu.memory_space<any>>) target(%27 : memref<128xf32, #tpu.memory_space<vmem>>) target_semaphore(%29 : memref<!tpu.dma_semaphore, #tpu.memory_space<semaphore_mem>>)
    %c3_i32 = arith.constant 3 : i32
    %30 = arith.addi %2, %c3_i32 : i32
    %31 = arith.index_cast %30 : i32 to index
    %32 = memref.load %arg2[%31] : memref<16xi32, #tpu.memory_space<smem>>
    %c3_i32_13 = arith.constant 3 : i32
    %c3_i32_14 = arith.constant 3 : i32
    %c0_i32_15 = arith.constant 0 : i32
    %33 = tpu.memref_slice %arg3[%32, %c0_i32_15] : memref<64x128xf32, #tpu.memory_space<any>> -> memref<1x128xf32, #tpu.memory_space<any>>
    %34 = tpu.memref_squeeze %33 : memref<1x128xf32, #tpu.memory_space<any>> -> memref<128xf32, #tpu.memory_space<any>>
    %c0_i32_16 = arith.constant 0 : i32
    %35 = tpu.memref_slice %arg6[%c3_i32_13, %c0_i32_16] : memref<8x128xf32, #tpu.memory_space<vmem>> -> memref<1x128xf32, #tpu.memory_space<vmem>>
    %36 = tpu.memref_squeeze %35 : memref<1x128xf32, #tpu.memory_space<vmem>> -> memref<128xf32, #tpu.memory_space<vmem>>
    %37 = tpu.memref_slice %arg7[%c3_i32_14] : memref<16x!tpu.dma_semaphore, #tpu.memory_space<semaphore_mem>> -> memref<1x!tpu.dma_semaphore, #tpu.memory_space<semaphore_mem>>
    %38 = tpu.memref_squeeze %37 : memref<1x!tpu.dma_semaphore, #tpu.memory_space<semaphore_mem>> -> memref<!tpu.dma_semaphore, #tpu.memory_space<semaphore_mem>>
    tpu.enqueue_dma source(%34 : memref<128xf32, #tpu.memory_space<any>>) target(%36 : memref<128xf32, #tpu.memory_space<vmem>>) target_semaphore(%38 : memref<!tpu.dma_semaphore, #tpu.memory_space<semaphore_mem>>)
    %c4_i32 = arith.constant 4 : i32
    %39 = arith.addi %2, %c4_i32 : i32
    %40 = arith.index_cast %39 : i32 to index
    %41 = memref.load %arg2[%40] : memref<16xi32, #tpu.memory_space<smem>>
    %c4_i32_17 = arith.constant 4 : i32
    %c4_i32_18 = arith.constant 4 : i32
    %c0_i32_19 = arith.constant 0 : i32
    %42 = tpu.memref_slice %arg3[%41, %c0_i32_19] : memref<64x128xf32, #tpu.memory_space<any>> -> memref<1x128xf32, #tpu.memory_space<any>>
    %43 = tpu.memref_squeeze %42 : memref<1x128xf32, #tpu.memory_space<any>> -> memref<128xf32, #tpu.memory_space<any>>
    %c0_i32_20 = arith.constant 0 : i32
    %44 = tpu.memref_slice %arg6[%c4_i32_17, %c0_i32_20] : memref<8x128xf32, #tpu.memory_space<vmem>> -> memref<1x128xf32, #tpu.memory_space<vmem>>
    %45 = tpu.memref_squeeze %44 : memref<1x128xf32, #tpu.memory_space<vmem>> -> memref<128xf32, #tpu.memory_space<vmem>>
    %46 = tpu.memref_slice %arg7[%c4_i32_18] : memref<16x!tpu.dma_semaphore, #tpu.memory_space<semaphore_mem>> -> memref<1x!tpu.dma_semaphore, #tpu.memory_space<semaphore_mem>>
    %47 = tpu.memref_squeeze %46 : memref<1x!tpu.dma_semaphore, #tpu.memory_space<semaphore_mem>> -> memref<!tpu.dma_semaphore, #tpu.memory_space<semaphore_mem>>
    tpu.enqueue_dma source(%43 : memref<128xf32, #tpu.memory_space<any>>) target(%45 : memref<128xf32, #tpu.memory_space<vmem>>) target_semaphore(%47 : memref<!tpu.dma_semaphore, #tpu.memory_space<semaphore_mem>>)
    %c5_i32 = arith.constant 5 : i32
    %48 = arith.addi %2, %c5_i32 : i32
    %49 = arith.index_cast %48 : i32 to index
    %50 = memref.load %arg2[%49] : memref<16xi32, #tpu.memory_space<smem>>
    %c5_i32_21 = arith.constant 5 : i32
    %c5_i32_22 = arith.constant 5 : i32
    %c0_i32_23 = arith.constant 0 : i32
    %51 = tpu.memref_slice %arg3[%50, %c0_i32_23] : memref<64x128xf32, #tpu.memory_space<any>> -> memref<1x128xf32, #tpu.memory_space<any>>
    %52 = tpu.memref_squeeze %51 : memref<1x128xf32, #tpu.memory_space<any>> -> memref<128xf32, #tpu.memory_space<any>>
    %c0_i32_24 = arith.constant 0 : i32
    %53 = tpu.memref_slice %arg6[%c5_i32_21, %c0_i32_24] : memref<8x128xf32, #tpu.memory_space<vmem>> -> memref<1x128xf32, #tpu.memory_space<vmem>>
    %54 = tpu.memref_squeeze %53 : memref<1x128xf32, #tpu.memory_space<vmem>> -> memref<128xf32, #tpu.memory_space<vmem>>
    %55 = tpu.memref_slice %arg7[%c5_i32_22] : memref<16x!tpu.dma_semaphore, #tpu.memory_space<semaphore_mem>> -> memref<1x!tpu.dma_semaphore, #tpu.memory_space<semaphore_mem>>
    %56 = tpu.memref_squeeze %55 : memref<1x!tpu.dma_semaphore, #tpu.memory_space<semaphore_mem>> -> memref<!tpu.dma_semaphore, #tpu.memory_space<semaphore_mem>>
    tpu.enqueue_dma source(%52 : memref<128xf32, #tpu.memory_space<any>>) target(%54 : memref<128xf32, #tpu.memory_space<vmem>>) target_semaphore(%56 : memref<!tpu.dma_semaphore, #tpu.memory_space<semaphore_mem>>)
    %c6_i32 = arith.constant 6 : i32
    %57 = arith.addi %2, %c6_i32 : i32
    %58 = arith.index_cast %57 : i32 to index
    %59 = memref.load %arg2[%58] : memref<16xi32, #tpu.memory_space<smem>>
    %c6_i32_25 = arith.constant 6 : i32
    %c6_i32_26 = arith.constant 6 : i32
    %c0_i32_27 = arith.constant 0 : i32
    %60 = tpu.memref_slice %arg3[%59, %c0_i32_27] : memref<64x128xf32, #tpu.memory_space<any>> -> memref<1x128xf32, #tpu.memory_space<any>>
    %61 = tpu.memref_squeeze %60 : memref<1x128xf32, #tpu.memory_space<any>> -> memref<128xf32, #tpu.memory_space<any>>
    %c0_i32_28 = arith.constant 0 : i32
    %62 = tpu.memref_slice %arg6[%c6_i32_25, %c0_i32_28] : memref<8x128xf32, #tpu.memory_space<vmem>> -> memref<1x128xf32, #tpu.memory_space<vmem>>
    %63 = tpu.memref_squeeze %62 : memref<1x128xf32, #tpu.memory_space<vmem>> -> memref<128xf32, #tpu.memory_space<vmem>>
    %64 = tpu.memref_slice %arg7[%c6_i32_26] : memref<16x!tpu.dma_semaphore, #tpu.memory_space<semaphore_mem>> -> memref<1x!tpu.dma_semaphore, #tpu.memory_space<semaphore_mem>>
    %65 = tpu.memref_squeeze %64 : memref<1x!tpu.dma_semaphore, #tpu.memory_space<semaphore_mem>> -> memref<!tpu.dma_semaphore, #tpu.memory_space<semaphore_mem>>
    tpu.enqueue_dma source(%61 : memref<128xf32, #tpu.memory_space<any>>) target(%63 : memref<128xf32, #tpu.memory_space<vmem>>) target_semaphore(%65 : memref<!tpu.dma_semaphore, #tpu.memory_space<semaphore_mem>>)
    %c7_i32 = arith.constant 7 : i32
    %66 = arith.addi %2, %c7_i32 : i32
    %67 = arith.index_cast %66 : i32 to index
    %68 = memref.load %arg2[%67] : memref<16xi32, #tpu.memory_space<smem>>
    %c7_i32_29 = arith.constant 7 : i32
    %c7_i32_30 = arith.constant 7 : i32
    %c0_i32_31 = arith.constant 0 : i32
    %69 = tpu.memref_slice %arg3[%68, %c0_i32_31] : memref<64x128xf32, #tpu.memory_space<any>> -> memref<1x128xf32, #tpu.memory_space<any>>
    %70 = tpu.memref_squeeze %69 : memref<1x128xf32, #tpu.memory_space<any>> -> memref<128xf32, #tpu.memory_space<any>>
    %c0_i32_32 = arith.constant 0 : i32
    %71 = tpu.memref_slice %arg6[%c7_i32_29, %c0_i32_32] : memref<8x128xf32, #tpu.memory_space<vmem>> -> memref<1x128xf32, #tpu.memory_space<vmem>>
    %72 = tpu.memref_squeeze %71 : memref<1x128xf32, #tpu.memory_space<vmem>> -> memref<128xf32, #tpu.memory_space<vmem>>
    %73 = tpu.memref_slice %arg7[%c7_i32_30] : memref<16x!tpu.dma_semaphore, #tpu.memory_space<semaphore_mem>> -> memref<1x!tpu.dma_semaphore, #tpu.memory_space<semaphore_mem>>
    %74 = tpu.memref_squeeze %73 : memref<1x!tpu.dma_semaphore, #tpu.memory_space<semaphore_mem>> -> memref<!tpu.dma_semaphore, #tpu.memory_space<semaphore_mem>>
    tpu.enqueue_dma source(%70 : memref<128xf32, #tpu.memory_space<any>>) target(%72 : memref<128xf32, #tpu.memory_space<vmem>>) target_semaphore(%74 : memref<!tpu.dma_semaphore, #tpu.memory_space<semaphore_mem>>)
    %c0_i32_33 = arith.constant 0 : i32
    %c8_i32_34 = arith.constant 8 : i32
    %75 = arith.addi %c0_i32_33, %c8_i32_34 : i32
    %c1_i32_35 = arith.constant 1 : i32
    scf.for %arg8 = %c0_i32_33 to %75 step %c1_i32_35  : i32 {
      %c1_i32_44 = arith.constant 1 : i32
      %83 = arith.muli %arg8, %c1_i32_44 : i32
      %c0_i32_45 = arith.constant 0 : i32
      %84 = arith.addi %c0_i32_45, %83 : i32
      %c16_i32 = arith.constant 16 : i32
      %c0_i32_46 = arith.constant 0 : i32
      %85 = arith.cmpi eq, %c16_i32, %c0_i32_46 : i32
      %c1_i32_47 = arith.constant 1 : i32
      %86 = arith.select %85, %c1_i32_47, %c16_i32 : i32
      %87 = arith.remsi %84, %86 : i32
      %c0_i32_48 = arith.constant 0 : i32
      %88 = arith.cmpi ne, %87, %c0_i32_48 : i32
      %c0_i32_49 = arith.constant 0 : i32
      %89 = arith.cmpi slt, %87, %c0_i32_49 : i32
      %c0_i32_50 = arith.constant 0 : i32
      %90 = arith.cmpi slt, %86, %c0_i32_50 : i32
      %91 = arith.xori %89, %90 : i1
      %92 = arith.andi %91, %88 : i1
      %93 = arith.addi %87, %86 : i32
      %94 = arith.select %92, %93, %87 : i32
      %c0_i32_51 = arith.constant 0 : i32
      %c0_i32_52 = arith.constant 0 : i32
      %95 = tpu.memref_slice %arg3[%c0_i32_51, %c0_i32_52] : memref<64x128xf32, #tpu.memory_space<any>> -> memref<1x128xf32, #tpu.memory_space<any>>
      %96 = tpu.memref_squeeze %95 : memref<1x128xf32, #tpu.memory_space<any>> -> memref<128xf32, #tpu.memory_space<any>>
      %c0_i32_53 = arith.constant 0 : i32
      %97 = tpu.memref_slice %arg6[%84, %c0_i32_53] : memref<8x128xf32, #tpu.memory_space<vmem>> -> memref<1x128xf32, #tpu.memory_space<vmem>>
      %98 = tpu.memref_squeeze %97 : memref<1x128xf32, #tpu.memory_space<vmem>> -> memref<128xf32, #tpu.memory_space<vmem>>
      %99 = tpu.memref_slice %arg7[%94] : memref<16x!tpu.dma_semaphore, #tpu.memory_space<semaphore_mem>> -> memref<1x!tpu.dma_semaphore, #tpu.memory_space<semaphore_mem>>
      %100 = tpu.memref_squeeze %99 : memref<1x!tpu.dma_semaphore, #tpu.memory_space<semaphore_mem>> -> memref<!tpu.dma_semaphore, #tpu.memory_space<semaphore_mem>>
      tpu.wait_dma2 semaphore(%100 : memref<!tpu.dma_semaphore, #tpu.memory_space<semaphore_mem>>) src(%96 : memref<128xf32, #tpu.memory_space<any>>) dst(%98 : memref<128xf32, #tpu.memory_space<vmem>>)
    }
    %c8_i32_36 = arith.constant 8 : i32
    %c0 = arith.constant 0 : index
    %c0_37 = arith.constant 0 : index
    %76 = vector.load %arg6[%c0, %c0_37] : memref<8x128xf32, #tpu.memory_space<vmem>>, vector<8x128xf32>
    %c0_38 = arith.constant 0 : index
    %c0_39 = arith.constant 0 : index
    %c0_40 = arith.constant 0 : index
    %77 = vector.load %arg4[%c0_38, %c0_39, %c0_40] : memref<1x8x128xf32, #tpu.memory_space<vmem>>, vector<1x8x128xf32>
    %78 = vector.shape_cast %77 : vector<1x8x128xf32> to vector<8x128xf32>
    %79 = arith.addf %76, %78 : vector<8x128xf32>
    %c0_41 = arith.constant 0 : index
    %c0_42 = arith.constant 0 : index
    %c0_43 = arith.constant 0 : index
    %80 = vector.load %arg5[%c0_41, %c0_42, %c0_43] : memref<1x8x128xf32, #tpu.memory_space<vmem>>, vector<1x8x128xf32>
    %81 = vector.shape_cast %80 : vector<1x8x128xf32> to vector<8x128xf32>
    %82 = vector.shape_cast %79 : vector<8x128xf32> to vector<1x8x128xf32>
    tpu.vector_store %arg5[%c0_41, %c0_42, %c0_43], %82 {strides = array<i32>} : memref<1x8x128xf32, #tpu.memory_space<vmem>>, vector<1x8x128xf32>,
    return
  }
  func.func @transform_1(%arg0: i32, %arg1: i32, %arg2: memref<16xi32, #tpu.memory_space<smem>>) -> (i32, i32, i32) {
    %c0_i32 = arith.constant 0 : i32
    %c0_i32_0 = arith.constant 0 : i32
    %c0_i32_1 = arith.constant 0 : i32
    return %c0_i32, %arg0, %c0_i32_0 : i32, i32, i32
  }
  func.func @transform_2(%arg0: i32, %arg1: i32, %arg2: memref<16xi32, #tpu.memory_space<smem>>) -> (i32, i32, i32) {
    %c0_i32 = arith.constant 0 : i32
    %c0_i32_0 = arith.constant 0 : i32
    return %arg1, %arg0, %c0_i32 : i32, i32, i32
  }
}

</mosaic_0001>

<llo_original>
// kernel: tpu_custom_call.1
$region0: #{tpu_custom_call.1}
  #allocation0 [shape = 'u32[]', space=smem, size = 0x4, offset = 0x4, fixed_abs, tag = 'smem constant byte address 0x4 - core index']
  #allocation1 [shape = 'u32[144,128]{1,0:T(1,128)}', space=vmem, size = 0x12000, scoped, tag = 'internal scratch']
  #allocation2 [shape = 'f32[8,128]{1,0:T(8,128)}', space=vmem, size = 0x1000, scoped, tag = 'scratch operand']
  #allocation3 [shape = 's32[16]{0}', space=sflag, size = 0x40, scoped, tag = 'scratch operand']
  #allocation4 [shape = 's32[1]{0}', space=sflag, size = 0x4, scoped, tag = 'scoped memory for tpu_custom_call.1']
  #allocation5 [shape = 'u8[512]{0}', space=smem, size = 0x200, scoped, tag = 'prefetched SMEM operand 0']
  #allocation10 [shape = 's32[]', space=sflag, size = 0x4, offset = 0, fixed_abs, tag = 'sflag constant byte address 0x0 - dummy sync flag']
  #allocation11 [shape = 's32[]', space=sflag, size = 0x4, offset = 0, fixed_abs, tag = 'sflag constant byte address 0x0 - dummy sync flag']
  #allocation12 [shape = 'u32[]', space=smem, size = 0x4, offset = 0x44, fixed_abs, tag = 'smem constant byte address 0x44 - assertion arg 0']
  #allocation13 [shape = 'u32[]', space=smem, size = 0x4, offset = 0x48, fixed_abs, tag = 'smem constant byte address 0x48 - assertion arg 1']
  #allocation14 [shape = 's32[]', space=sflag, size = 0x4, offset = 0, fixed_abs, tag = 'sflag constant byte address 0x0 - dummy sync flag']
  #allocation15 [shape = 's32[]', space=sflag, size = 0x4, offset = 0, fixed_abs, tag = 'sflag constant byte address 0x0 - dummy sync flag']
  #allocation16 [shape = 's32[]', space=sflag, size = 0x4, offset = 0, fixed_abs, tag = 'sflag constant byte address 0x0 - dummy sync flag']
  #allocation17 [shape = 's32[]', space=sflag, size = 0x4, offset = 0, fixed_abs, tag = 'sflag constant byte address 0x0 - dummy sync flag']
  #allocation18 [shape = 's32[]', space=sflag, size = 0x4, offset = 0, fixed_abs, tag = 'sflag constant byte address 0x0 - dummy sync flag']
  #allocation19 [shape = 's32[]', space=sflag, size = 0x4, offset = 0, fixed_abs, tag = 'sflag constant byte address 0x0 - dummy sync flag']
  #allocation20 [shape = 's32[]', space=sflag, size = 0x4, offset = 0, fixed_abs, tag = 'sflag constant byte address 0x0 - dummy sync flag']
  #allocation21 [shape = 's32[]', space=sflag, size = 0x4, offset = 0, fixed_abs, tag = 'sflag constant byte address 0x0 - dummy sync flag']
  #allocation22 [shape = 's32[]', space=sflag, size = 0x4, offset = 0, fixed_abs, tag = 'sflag constant byte address 0x0 - dummy sync flag']
  #allocation23 [shape = 's32[]', space=sflag, size = 0x4, offset = 0, fixed_abs, tag = 'sflag constant byte address 0x0 - dummy sync flag']
  #allocation24 [shape = 's32[]', space=sflag, size = 0x4, offset = 0, fixed_abs, tag = 'sflag constant byte address 0x0 - dummy sync flag']
  #allocation25 [shape = 's32[]', space=sflag, size = 0x4, offset = 0, fixed_abs, tag = 'sflag constant byte address 0x0 - dummy sync flag']
  #allocation26 [shape = 's32[]', space=sflag, size = 0x4, offset = 0, fixed_abs, tag = 'sflag constant byte address 0x0 - dummy sync flag']
  #allocation27 [shape = 's32[]', space=sflag, size = 0x4, offset = 0, fixed_abs, tag = 'sflag constant byte address 0x0 - dummy sync flag']
  %s0 = inlined_call_operand.hbm [shape: s32[16], index: 0, kind: input, shape index: {}]
  %s1 = inlined_call_operand.hbm [shape: f32[64,128], index: 1, kind: input, shape index: {}]
  %s2 = inlined_call_operand.hbm [shape: f32[1,8,128], index: 2, kind: input, shape index: {}]
  %s3 = inlined_call_operand.hbm [shape: f32[2,8,128], index: 3, kind: output, shape index: {}]
  %s4 = sld [smem:[#allocation0]]
  $region80: #{tpu_custom_call.1} parent=0
    _
  %s6 = ssub.s32 1, %s4
  %s7 = scalar_select 0, %s6, %s4
  %9 = dma.hbm_to_smem %s0, 16, [#allocation5], [#allocation4]
  %10 = dma.done [#allocation4], 16
  %11 = sfence
  $region1: #{tpu_custom_call.1} parent=0
    #allocation6 [shape = 'u8[4096]{0}', space=vmem, size = 0x1000, scoped, tag = 'input window, operand 2, single buffered']
    #allocation7 [shape = 's32[2]{0}', space=sflag, size = 0x8, scoped, tag = 'scoped memory for tpu_custom_call.1']
    #allocation8 [shape = 's32[2]{0}', space=sflag, size = 0x8, scoped, tag = 'scoped memory for tpu_custom_call.1']
    #allocation9 [shape = 'u8[8192]{0}', space=vmem, size = 0x2000, scoped, tag = 'output window, operand 0']
    %12 = vsyncpa [#allocation7], 0
    %13 = vsyncpa [#allocation8], 0
    %s14 = scalar_lea.sflag [#allocation8], 1
    %15 = vsyncpa %s14, 0
    loop: start=0, step=1, limit=4
    $region2: #{tpu_custom_call.1} parent=1 // loop_pre_header
      _
    $region3: #{tpu_custom_call.1} parent=1 // loop_header
      %s17 = sphi 0, %s21
      %p18 = scmp.ge.s32.totalorder %s17, 4
      %s24 = sphi 0, %s36
      %s25 = sphi 0, %s32
      %s26 = sphi 0, %s24
      %s27 = sphi 0, %s25
      %s28 = sphi 0, %s26
      %s29 = sphi 0, %s27
      %s39 = sphi 0, %s41
      %s42 = sphi 0, %s39
      %s43 = sphi 0, %s42
      %s59 = sphi 0, %s43
      %s67 = sphi 0, %s69
      %s70 = sphi 0, %s67
      %s71 = sphi 0, %s70
      %s87 = sphi 0, %s71
    $region4: #{tpu_custom_call.1} parent=1 // loop_header_branch
      %20 = sbr.rel (%p18) target = $region8
    $region5: #{tpu_custom_call.1} parent=1 // loop_body
      %s22 = ssub.s32 %s17, 1
      %s23 = ssub.s32 %s17, 2
      %s30 = sadd.s32 1, %s25
      %p31 = scmp.ge.s32.totalorder %s30, 2
      %s32 = scalar_select %p31, 0, %s30
      %s33 = sadd.s32 1, %s24
      %s34 = scalar_select %p31, %s33, %s24
      %p35 = scmp.ge.s32.totalorder %s34, 1
      %s36 = scalar_select %p35, 0, %s34
      %s37 = ssub.s32 %s24, %s36
      %p38 = scmp.eq.s32.totalorder %s37, 0
      %s40 = sadd.s32 %s39, 1
      %s41 = scalar_select %p38, %s39, %s40
      %p44 = pneg %p38
      %p45 = scmp.eq.s32.totalorder %s17, 1
      %p46 = por %p44, %p45
      %p47 = scmp.ne.s32.totalorder %s39, %s42
      %p48 = scmp.eq.s32.totalorder %s17, 0
      %p49 = por %p47, %p48
      %p50 = scmp.ne.s32.totalorder %s39, %s42
      %p51 = scmp.eq.s32.totalorder %s22, 1
      %p52 = por %p50, %p51
      %p53 = scmp.ne.s32.totalorder %s42, %s43
      %p54 = scmp.eq.s32.totalorder %s22, 0
      %p55 = por %p53, %p54
      %p56 = scmp.ne.s32.totalorder %s42, %s43
      %p57 = scmp.eq.s32.totalorder %s23, 1
      %p58 = por %p56, %p57
      %p60 = scmp.ne.s32.totalorder %s43, %s59
      %p61 = scmp.eq.s32.totalorder %s23, 0
      %p62 = por %p60, %p61
      %s63 = ssub.s32 %s25, %s32
      %s64 = ssub.s32 %s24, %s36
      %s65 = sor.u32 %s63, %s64
      %p66 = scmp.eq.s32.totalorder %s65, 0
      %s68 = sadd.s32 %s67, 1
      %s69 = scalar_select %p66, %s67, %s68
      %p72 = pneg %p66
      %p73 = scmp.eq.s32.totalorder %s17, 1
      %p74 = por %p72, %p73
      %p75 = scmp.ne.s32.totalorder %s67, %s70
      %p76 = scmp.eq.s32.totalorder %s17, 0
      %p77 = por %p75, %p76
      %p78 = scmp.ne.s32.totalorder %s67, %s70
      %p79 = scmp.eq.s32.totalorder %s22, 1
      %p80 = por %p78, %p79
      %p81 = scmp.ne.s32.totalorder %s70, %s71
      %p82 = scmp.eq.s32.totalorder %s22, 0
      %p83 = por %p81, %p82
      %p84 = scmp.ne.s32.totalorder %s70, %s71
      %p85 = scmp.eq.s32.totalorder %s23, 1
      %p86 = por %p84, %p85
      %p88 = scmp.ne.s32.totalorder %s71, %s87
      %p89 = scmp.eq.s32.totalorder %s23, 0
      %p90 = por %p88, %p89
      %p91 = scmp.le.s32.totalorder 1, %s17
      %p92 = scmp.lt.s32.totalorder %s17, 3
      %p93 = pnand %p91, %p92
      %p94 = pneg %p93
      // Predicated region
      $region9: #{tpu_custom_call.1} parent=5 // pred_check
        _
      $region10: #{tpu_custom_call.1} parent=5 // pred_check_branch
        %96 = sbr.rel (%p93) target = $region12
      $region11: #{tpu_custom_call.1} parent=5 // pred_region
        %s97 = ssub.s32 %s17, 1
        // Predicated region
        $region13: #{tpu_custom_call.1} parent=11 // pred_check
          %p98 = pneg %p55
        $region14: #{tpu_custom_call.1} parent=11 // pred_check_branch
          %100 = sbr.rel (%p98) target = $region16
        $region15: #{tpu_custom_call.1} parent=11 // pred_region
          %s102 = ssub.s32 128, 128
          %103 = vsyncadd [#allocation7], %s102
          %s104 = smul.addr %s26, 128
          %s105 = scalar_lea.hbm %s2, %s104
          %s107 = sshll.u32 [#allocation6], 4
          %s108 = int_to_ptr.vmem [resolvable:$true] %s107
          %110 = dma.hbm_to_vmem [thread:$0]  %s105, 128, %s108, [#allocation7]
        $region16: #{tpu_custom_call.1} parent=11 // pred_fallthru
          _
      $region12: #{tpu_custom_call.1} parent=5 // pred_fallthru
        _
      %p111 = scmp.lt.s32.totalorder %s17, 2
      // Predicated region
      $region17: #{tpu_custom_call.1} parent=5 // pred_check
        %p112 = pneg %p111
      $region18: #{tpu_custom_call.1} parent=5 // pred_check_branch
        %114 = sbr.rel (%p112) target = $region20
      $region19: #{tpu_custom_call.1} parent=5 // pred_region
        _
      $region20: #{tpu_custom_call.1} parent=5 // pred_fallthru
        _
      %p115 = scmp.le.s32.totalorder 1, %s17
      %p116 = scmp.lt.s32.totalorder %s17, 3
      %p117 = pnand %p115, %p116
      %p118 = pneg %p117
      // Predicated region
      $region21: #{tpu_custom_call.1} parent=5 // pred_check
        _
      $region22: #{tpu_custom_call.1} parent=5 // pred_check_branch
        %120 = sbr.rel (%p117) target = $region24
      $region23: #{tpu_custom_call.1} parent=5 // pred_region
        %s121 = ssub.s32 %s17, 1
        // Predicated region
        $region25: #{tpu_custom_call.1} parent=23 // pred_check
          %p122 = pneg %p55
        $region26: #{tpu_custom_call.1} parent=23 // pred_check_branch
          %124 = sbr.rel (%p122) target = $region28
        $region27: #{tpu_custom_call.1} parent=23 // pred_region
          %125 = dma.done [#allocation7], 128
        $region28: #{tpu_custom_call.1} parent=23 // pred_fallthru
          _
        %p126 = pneg %p55
        %p127 = pneg %p52
        %p128 = pneg %p83
        %p129 = pneg %p80
        %s130 = sand.u32 %s70, 1
        %s131 = scalar_lea.sflag [#allocation8], %s130
        %s132 = sand.u32 %s70, 1
        %s133 = smul.addr %s132, 8
        %s134 = scalar_lea.vmem [#allocation9], %s133
        %s135 = smul.u32 %s27, 8
        %s136 = smul.u32 %s26, 8
        %s137 = sadd.s32 %s135, %s136
        %s138 = sld [smem:[#allocation5 + %s137]]
        %s139 = smul.addr %s138, 16
        %s140 = scalar_lea.hbm %s1, %s139
        // Predicated region
        $region29: #{tpu_custom_call.1} parent=23 // pred_check
          _
        $region30: #{tpu_custom_call.1} parent=23 // pred_check_branch
          %142 = sbr.rel target = $region32
        $region31: #{tpu_custom_call.1} parent=23 // pred_region
          %143 = sst [smem:[#allocation12]] [#allocation11]
          %144 = sst [smem:[#allocation13]] [#allocation10]
        $region32: #{tpu_custom_call.1} parent=23 // pred_fallthru
          _
        %146 = shalt.err (0)
        %s148 = sshll.u32 [#allocation2], 4
        %s149 = int_to_ptr.vmem [resolvable:$true] %s148
        %151 = dma.hbm_to_vmem [thread:$0]  %s140, 16, %s149, [#allocation3]
        %s152 = sadd.s32 %s137, 1
        %s153 = sld [smem:[#allocation5 + %s152]]
        %s154 = smul.addr %s153, 16
        %s155 = scalar_lea.hbm %s1, %s154
        %s156 = scalar_lea.vmem [#allocation2], 1
        %s157 = scalar_lea.sflag [#allocation3], 1
        // Predicated region
        $region33: #{tpu_custom_call.1} parent=23 // pred_check
          _
        $region34: #{tpu_custom_call.1} parent=23 // pred_check_branch
          %159 = sbr.rel target = $region36
        $region35: #{tpu_custom_call.1} parent=23 // pred_region
          %160 = sst [smem:[#allocation12]] [#allocation15]
          %161 = sst [smem:[#allocation13]] [#allocation14]
        $region36: #{tpu_custom_call.1} parent=23 // pred_fallthru
          _
        %163 = shalt.err (0)
        %s165 = sshll.u32 %s156, 4
        %s166 = int_to_ptr.vmem [resolvable:$true] %s165
        %168 = dma.hbm_to_vmem [thread:$0]  %s155, 16, %s166, %s157
        %s169 = sadd.s32 %s137, 2
        %s170 = sld [smem:[#allocation5 + %s169]]
        %s171 = smul.addr %s170, 16
        %s172 = scalar_lea.hbm %s1, %s171
        %s173 = scalar_lea.vmem [#allocation2], 2
        %s174 = scalar_lea.sflag [#allocation3], 2
        // Predicated region
        $region37: #{tpu_custom_call.1} parent=23 // pred_check
          _
        $region38: #{tpu_custom_call.1} parent=23 // pred_check_branch
          %176 = sbr.rel target = $region40
        $region39: #{tpu_custom_call.1} parent=23 // pred_region
          %177 = sst [smem:[#allocation12]] [#allocation17]
          %178 = sst [smem:[#allocation13]] [#allocation16]
        $region40: #{tpu_custom_call.1} parent=23 // pred_fallthru
          _
        %180 = shalt.err (0)
        %s182 = sshll.u32 %s173, 4
        %s183 = int_to_ptr.vmem [resolvable:$true] %s182
        %185 = dma.hbm_to_vmem [thread:$0]  %s172, 16, %s183, %s174
        %s186 = sadd.s32 %s137, 3
        %s187 = sld [smem:[#allocation5 + %s186]]
        %s188 = smul.addr %s187, 16
        %s189 = scalar_lea.hbm %s1, %s188
        %s190 = scalar_lea.vmem [#allocation2], 3
        %s191 = scalar_lea.sflag [#allocation3], 3
        // Predicated region
        $region41: #{tpu_custom_call.1} parent=23 // pred_check
          _
        $region42: #{tpu_custom_call.1} parent=23 // pred_check_branch
          %193 = sbr.rel target = $region44
        $region43: #{tpu_custom_call.1} parent=23 // pred_region
          %194 = sst [smem:[#allocation12]] [#allocation19]
          %195 = sst [smem:[#allocation13]] [#allocation18]
        $region44: #{tpu_custom_call.1} parent=23 // pred_fallthru
          _
        %197 = shalt.err (0)
        %s199 = sshll.u32 %s190, 4
        %s200 = int_to_ptr.vmem [resolvable:$true] %s199
        %202 = dma.hbm_to_vmem [thread:$0]  %s189, 16, %s200, %s191
        %s203 = sadd.s32 %s137, 4
        %s204 = sld [smem:[#allocation5 + %s203]]
        %s205 = smul.addr %s204, 16
        %s206 = scalar_lea.hbm %s1, %s205
        %s207 = scalar_lea.vmem [#allocation2], 4
        %s208 = scalar_lea.sflag [#allocation3], 4
        // Predicated region
        $region45: #{tpu_custom_call.1} parent=23 // pred_check
          _
        $region46: #{tpu_custom_call.1} parent=23 // pred_check_branch
          %210 = sbr.rel target = $region48
        $region47: #{tpu_custom_call.1} parent=23 // pred_region
          %211 = sst [smem:[#allocation12]] [#allocation21]
          %212 = sst [smem:[#allocation13]] [#allocation20]
        $region48: #{tpu_custom_call.1} parent=23 // pred_fallthru
          _
        %214 = shalt.err (0)
        %s216 = sshll.u32 %s207, 4
        %s217 = int_to_ptr.vmem [resolvable:$true] %s216
        %219 = dma.hbm_to_vmem [thread:$0]  %s206, 16, %s217, %s208
        %s220 = sadd.s32 %s137, 5
        %s221 = sld [smem:[#allocation5 + %s220]]
        %s222 = smul.addr %s221, 16
        %s223 = scalar_lea.hbm %s1, %s222
        %s224 = scalar_lea.vmem [#allocation2], 5
        %s225 = scalar_lea.sflag [#allocation3], 5
        // Predicated region
        $region49: #{tpu_custom_call.1} parent=23 // pred_check
          _
        $region50: #{tpu_custom_call.1} parent=23 // pred_check_branch
          %227 = sbr.rel target = $region52
        $region51: #{tpu_custom_call.1} parent=23 // pred_region
          %228 = sst [smem:[#allocation12]] [#allocation23]
          %229 = sst [smem:[#allocation13]] [#allocation22]
        $region52: #{tpu_custom_call.1} parent=23 // pred_fallthru
          _
        %231 = shalt.err (0)
        %s233 = sshll.u32 %s224, 4
        %s234 = int_to_ptr.vmem [resolvable:$true] %s233
        %236 = dma.hbm_to_vmem [thread:$0]  %s223, 16, %s234, %s225
        %s237 = sadd.s32 %s137, 6
        %s238 = sld [smem:[#allocation5 + %s237]]
        %s239 = smul.addr %s238, 16
        %s240 = scalar_lea.hbm %s1, %s239
        %s241 = scalar_lea.vmem [#allocation2], 6
        %s242 = scalar_lea.sflag [#allocation3], 6
        // Predicated region
        $region53: #{tpu_custom_call.1} parent=23 // pred_check
          _
        $region54: #{tpu_custom_call.1} parent=23 // pred_check_branch
          %244 = sbr.rel target = $region56
        $region55: #{tpu_custom_call.1} parent=23 // pred_region
          %245 = sst [smem:[#allocation12]] [#allocation25]
          %246 = sst [smem:[#allocation13]] [#allocation24]
        $region56: #{tpu_custom_call.1} parent=23 // pred_fallthru
          _
        %248 = shalt.err (0)
        %s250 = sshll.u32 %s241, 4
        %s251 = int_to_ptr.vmem [resolvable:$true] %s250
        %253 = dma.hbm_to_vmem [thread:$0]  %s240, 16, %s251, %s242
        %s254 = sadd.s32 %s137, 7
        %s255 = sld [smem:[#allocation5 + %s254]]
        %s256 = smul.addr %s255, 16
        %s257 = scalar_lea.hbm %s1, %s256
        %s258 = scalar_lea.vmem [#allocation2], 7
        %s259 = scalar_lea.sflag [#allocation3], 7
        // Predicated region
        $region57: #{tpu_custom_call.1} parent=23 // pred_check
          _
        $region58: #{tpu_custom_call.1} parent=23 // pred_check_branch
          %261 = sbr.rel target = $region60
        $region59: #{tpu_custom_call.1} parent=23 // pred_region
          %262 = sst [smem:[#allocation12]] [#allocation27]
          %263 = sst [smem:[#allocation13]] [#allocation26]
        $region60: #{tpu_custom_call.1} parent=23 // pred_fallthru
          _
        %265 = shalt.err (0)
        %s267 = sshll.u32 %s258, 4
        %s268 = int_to_ptr.vmem [resolvable:$true] %s267
        %270 = dma.hbm_to_vmem [thread:$0]  %s257, 16, %s268, %s259
        loop: start=0, step=1, limit=8
        $region61: #{tpu_custom_call.1} parent=23 // loop_pre_header
          _
        $region62: #{tpu_custom_call.1} parent=23 // loop_header
          %s272 = sphi 0, %s276
          %p273 = scmp.ge.s32.totalorder %s272, 8
        $region63: #{tpu_custom_call.1} parent=23 // loop_header_branch
          %275 = sbr.rel (%p273) target = $region67
        $region64: #{tpu_custom_call.1} parent=23 // loop_body
          %p277 = scmp.lt.s32.totalorder %s272, 0
          %s278 = ssub.s32 0, %s272
          %s279 = scalar_select %p277, %s278, %s272
          %s280 = sand.u32 %s279, 15
          %s281 = ssub.s32 0, %s280
          %s282 = scalar_select %p277, %s281, %s280
          %p283 = scmp.ne.s32.totalorder %s282, 0
          %p284 = scmp.lt.s32.totalorder %s282, 0
          %p285 = pnand %p284, %p283
          %p286 = pneg %p285
          %s287 = sadd.s32 %s282, 16
          %s288 = scalar_select %p286, %s287, %s282
          %s289 = scalar_lea.sflag [#allocation3], %s288
          %291 = dma.done %s289, 16
        $region65: #{tpu_custom_call.1} parent=23 // loop_footer
          %s276 = sadd.s32 1, %s272
        $region66: #{tpu_custom_call.1} parent=23 // loop_footer_branch
          %271 = sbr.rel target = $region62
        $region67: #{tpu_custom_call.1} parent=23 // loop_exit
          _
        %v292 = vld [vmem:[#allocation2] sm:$0xff]
        %v293 = vld [vmem:[#allocation6] sm:$0xff]
        %v294 = vadd.f32 %v292, %v293
        %295 = vst [vmem:[%s134] sm:$0xff] %v294
        %s296 = sand.u32 %s70, 1
        %s297 = scalar_lea.sflag [#allocation8], %s296
        %s298 = sand.u32 %s70, 1
        %s299 = smul.addr %s298, 8
        %s300 = scalar_lea.vmem [#allocation9], %s299
        // Predicated region
        $region68: #{tpu_custom_call.1} parent=23 // pred_check
          %p301 = pneg %p80
        $region69: #{tpu_custom_call.1} parent=23 // pred_check_branch
          %303 = sbr.rel (%p301) target = $region71
        $region70: #{tpu_custom_call.1} parent=23 // pred_region
          %s305 = ssub.s32 128, 128
          %306 = vsyncadd %s297, %s305
          %s307 = sadd.s32 %s26, %s27
          %s308 = smul.addr %s307, 128
          %s309 = scalar_lea.hbm %s3, %s308
          %s311 = sshll.u32 %s300, 4
          %s312 = int_to_ptr.vmem [resolvable:$true] %s311
          %314 = dma.vmem_to_hbm [thread:$0]  %s312, 128, %s309, %s297
        $region71: #{tpu_custom_call.1} parent=23 // pred_fallthru
          _
      $region24: #{tpu_custom_call.1} parent=5 // pred_fallthru
        _
      %p315 = scmp.le.s32.totalorder 2, %s17
      // Predicated region
      $region72: #{tpu_custom_call.1} parent=5 // pred_check
        %p316 = pneg %p315
      $region73: #{tpu_custom_call.1} parent=5 // pred_check_branch
        %318 = sbr.rel (%p316) target = $region75
      $region74: #{tpu_custom_call.1} parent=5 // pred_region
        %s319 = ssub.s32 %s17, 2
        // Predicated region
        $region76: #{tpu_custom_call.1} parent=74 // pred_check
          %p320 = pneg %p86
        $region77: #{tpu_custom_call.1} parent=74 // pred_check_branch
          %322 = sbr.rel (%p320) target = $region79
        $region78: #{tpu_custom_call.1} parent=74 // pred_region
          %s323 = sand.u32 %s71, 1
          %s324 = scalar_lea.sflag [#allocation8], %s323
          %s325 = sand.u32 %s71, 1
          %s326 = smul.addr %s325, 8
          %s327 = scalar_lea.vmem [#allocation9], %s326
          %328 = dma.done %s324, 128
        $region79: #{tpu_custom_call.1} parent=74 // pred_fallthru
          _
      $region75: #{tpu_custom_call.1} parent=5 // pred_fallthru
        _
    $region6: #{tpu_custom_call.1} parent=1 // loop_footer
      %s21 = sadd.s32 1, %s17
    $region7: #{tpu_custom_call.1} parent=1 // loop_footer_branch
      %16 = sbr.rel target = $region3
    $region8: #{tpu_custom_call.1} parent=1 // loop_exit
      _
    %329 = vsyncpa [#allocation7], 1
    %s330 = scalar_lea.sflag [#allocation7], 1
    %331 = vsyncpa %s330, 1
    %332 = vsyncpa [#allocation8], 1
    %s333 = scalar_lea.sflag [#allocation8], 1
    %334 = vsyncpa %s333, 1
  %335 = vsyncmov [#allocation3]
  %s336 = vpop.sfrf %335
  %p337 = scmp.eq.s32.totalorder %s336, 0
  %p338 = pneg %p337
  %340 = shalt.err (%p338)
  %s341 = scalar_lea.sflag [#allocation3], 1
  %342 = vsyncmov %s341
  %s343 = vpop.sfrf %342
  %p344 = scmp.eq.s32.totalorder %s343, 0
  %p345 = pneg %p344
  %347 = shalt.err (%p345)
  %s348 = scalar_lea.sflag [#allocation3], 2
  %349 = vsyncmov %s348
  %s350 = vpop.sfrf %349
  %p351 = scmp.eq.s32.totalorder %s350, 0
  %p352 = pneg %p351
  %354 = shalt.err (%p352)
  %s355 = scalar_lea.sflag [#allocation3], 3
  %356 = vsyncmov %s355
  %s357 = vpop.sfrf %356
  %p358 = scmp.eq.s32.totalorder %s357, 0
  %p359 = pneg %p358
  %361 = shalt.err (%p359)
  %s362 = scalar_lea.sflag [#allocation3], 4
  %363 = vsyncmov %s362
  %s364 = vpop.sfrf %363
  %p365 = scmp.eq.s32.totalorder %s364, 0
  %p366 = pneg %p365
  %368 = shalt.err (%p366)
  %s369 = scalar_lea.sflag [#allocation3], 5
  %370 = vsyncmov %s369
  %s371 = vpop.sfrf %370
  %p372 = scmp.eq.s32.totalorder %s371, 0
  %p373 = pneg %p372
  %375 = shalt.err (%p373)
  %s376 = scalar_lea.sflag [#allocation3], 6
  %377 = vsyncmov %s376
  %s378 = vpop.sfrf %377
  %p379 = scmp.eq.s32.totalorder %s378, 0
  %p380 = pneg %p379
  %382 = shalt.err (%p380)
  %s383 = scalar_lea.sflag [#allocation3], 7
  %384 = vsyncmov %s383
  %s385 = vpop.sfrf %384
  %p386 = scmp.eq.s32.totalorder %s385, 0
  %p387 = pneg %p386
  %389 = shalt.err (%p387)
  %s390 = scalar_lea.sflag [#allocation3], 8
  %391 = vsyncmov %s390
  %s392 = vpop.sfrf %391
  %p393 = scmp.eq.s32.totalorder %s392, 0
  %p394 = pneg %p393
  %396 = shalt.err (%p394)
  %s397 = scalar_lea.sflag [#allocation3], 9
  %398 = vsyncmov %s397
  %s399 = vpop.sfrf %398
  %p400 = scmp.eq.s32.totalorder %s399, 0
  %p401 = pneg %p400
  %403 = shalt.err (%p401)
  %s404 = scalar_lea.sflag [#allocation3], 10
  %405 = vsyncmov %s404
  %s406 = vpop.sfrf %405
  %p407 = scmp.eq.s32.totalorder %s406, 0
  %p408 = pneg %p407
  %410 = shalt.err (%p408)
  %s411 = scalar_lea.sflag [#allocation3], 11
  %412 = vsyncmov %s411
  %s413 = vpop.sfrf %412
  %p414 = scmp.eq.s32.totalorder %s413, 0
  %p415 = pneg %p414
  %417 = shalt.err (%p415)
  %s418 = scalar_lea.sflag [#allocation3], 12
  %419 = vsyncmov %s418
  %s420 = vpop.sfrf %419
  %p421 = scmp.eq.s32.totalorder %s420, 0
  %p422 = pneg %p421
  %424 = shalt.err (%p422)
  %s425 = scalar_lea.sflag [#allocation3], 13
  %426 = vsyncmov %s425
  %s427 = vpop.sfrf %426
  %p428 = scmp.eq.s32.totalorder %s427, 0
  %p429 = pneg %p428
  %431 = shalt.err (%p429)
  %s432 = scalar_lea.sflag [#allocation3], 14
  %433 = vsyncmov %s432
  %s434 = vpop.sfrf %433
  %p435 = scmp.eq.s32.totalorder %s434, 0
  %p436 = pneg %p435
  %438 = shalt.err (%p436)
  %s439 = scalar_lea.sflag [#allocation3], 15
  %440 = vsyncmov %s439
  %s441 = vpop.sfrf %440
  %p442 = scmp.eq.s32.totalorder %s441, 0
  %p443 = pneg %p442
  %445 = shalt.err (%p443)

</llo_original>
